<compile_context>
chip_gen: v6e
topology: v6e:2x2x1
jax: 0.10.0
libtpu: 0.0.40
codegen_flags: <defaults>
</compile_context>

<pallas_src>
import jax
import jax.numpy as jnp
from jax import lax
from jax.experimental import pallas as pl
from jax.experimental.pallas import tpu as pltpu

# Row-tile size: large enough to sit near the HBM roofline (>=512 rows), multiple
# of 8 (f32) and 16 (bf16) sublanes. A 2048 x 32 f32 tile is only 256 KiB, so it is
# cheap even under v7x's 32 MiB scoped-VMEM default with double buffering.
_TM_MAX = 2048


def _linear_head_kernel(x_ref, w_ref, b_ref, o_ref):
    # x_ref: [TM, D]   w_ref: [N, D] (PyTorch nn.Linear layout)   b_ref: [1, N]   o_ref: [TM, N]
    acc = lax.dot_general(
        x_ref[...], w_ref[...],
        dimension_numbers=(((1,), (1,)), ((), ())),   # contract D against D (== x @ W.T)
        preferred_element_type=jnp.float32)           # f32 accumulation on the MXU
    o_ref[...] = (acc + b_ref[...].astype(jnp.float32)).astype(o_ref.dtype)


def temporal_classifier_head(x, weight, bias=None):
    """y = x @ weight.T + bias over the last dim, in x's native dtype.

    x:      [..., in_dim]
    weight: [num_classes, in_dim]   (PyTorch nn.Linear layout, passed untransposed)
    bias:   [num_classes] or None
    returns [..., num_classes] with dtype == x.dtype
    """
    *lead, in_dim = x.shape
    num_classes = weight.shape[0]
    m = 1
    for d in lead:
        m *= d

    x2d = x.reshape(m, in_dim)                       # metadata-only reshape, native dtype
    if bias is None:
        b_row = jnp.zeros((1, num_classes), x.dtype)
    else:
        b_row = bias.reshape(1, num_classes)

    # Row tiling: single full block for small batches (block dims == array dims is
    # always legal), large pipelined tiles otherwise. pl.cdiv handles the partial
    # last tile (Pallas clips the out-of-bounds store rows).
    tm = m if m <= _TM_MAX else _TM_MAX
    grid = (pl.cdiv(m, tm),)

    out_dtype = x.dtype
    itemsize = jnp.dtype(out_dtype).itemsize
    cost = pl.CostEstimate(
        flops=2 * m * in_dim * num_classes,
        transcendentals=0,
        bytes_accessed=(m * in_dim + num_classes * in_dim + num_classes
                        + m * num_classes) * itemsize)

    out = pl.pallas_call(
        _linear_head_kernel,
        out_shape=jax.ShapeDtypeStruct((m, num_classes), out_dtype),
        grid=grid,
        in_specs=[
            pl.BlockSpec((tm, in_dim), lambda i: (i, 0)),            # x: pipelined row tiles
            pl.BlockSpec((num_classes, in_dim), lambda i: (0, 0)),   # W: fetched once, VMEM-resident
            pl.BlockSpec((1, num_classes), lambda i: (0, 0)),        # bias: fetched once
        ],
        out_specs=pl.BlockSpec((tm, num_classes), lambda i: (i, 0)),
        compiler_params=pltpu.CompilerParams(
            dimension_semantics=("parallel",)),                      # shards tiles across v7x's 2 TCs
        cost_estimate=cost,
    )(x2d, weight, b_row)

    return out.reshape(*lead, num_classes)


if __name__ == "__main__":
    # TemporalClassifierHead(in_dim=32, num_classes=16) on x of shape [B=2, T=8, 32].
    B, T, in_dim, num_classes = 2, 8, 32, 16

    key = jax.random.PRNGKey(0)
    kx, kw, kb = jax.random.split(key, 3)

    x = jax.random.normal(kx, (B, T, in_dim), jnp.float32)
    weight = (1.0 / jnp.sqrt(in_dim)) * jax.random.normal(kw, (num_classes, in_dim), jnp.float32)
    bias = 0.1 * jax.random.normal(kb, (num_classes,), jnp.float32)

    # Small-batch path (single full block).
    out = jax.block_until_ready(temporal_classifier_head(x, weight, bias))
    ref = jnp.einsum("btd,nd->btn", x, weight) + bias[None, None, :]
    assert out.shape == (B, T, num_classes), out.shape
    assert out.dtype == x.dtype, out.dtype
    assert jnp.allclose(out, ref, atol=1e-5, rtol=1e-5), float(jnp.max(jnp.abs(out - ref)))

    # Multi-tile + partial-last-tile path (m = 5000 > TM_MAX, m % TM_MAX != 0).
    x_big = jax.random.normal(kx, (5, 1000, in_dim), jnp.float32)
    out_big = jax.block_until_ready(temporal_classifier_head(x_big, weight, bias))
    ref_big = jnp.einsum("btd,nd->btn", x_big, weight) + bias[None, None, :]
    assert jnp.allclose(out_big, ref_big, atol=1e-4, rtol=1e-4), \
        float(jnp.max(jnp.abs(out_big - ref_big)))

    # bias=False path of nn.Linear.
    out_nb = jax.block_until_ready(temporal_classifier_head(x, weight, None))
    ref_nb = jnp.einsum("btd,nd->btn", x, weight)
    assert jnp.allclose(out_nb, ref_nb, atol=1e-5, rtol=1e-5)

    print("KERNEL_OK")
</pallas_src>

<mosaic_0001>
module attributes {stable_mosaic.version = 11 : i64} {
  func.func @_linear_head_kernel(%arg0: i32, %arg1: memref<16x32xf32, #tpu.memory_space<vmem>>, %arg2: memref<16x32xf32, #tpu.memory_space<vmem>>, %arg3: memref<1x16xf32, #tpu.memory_space<vmem>>, %arg4: memref<16x16xf32, #tpu.memory_space<vmem>>) attributes {dimension_semantics = [#tpu.dimension_semantics<parallel>], iteration_bounds = array<i64: 1>, scalar_prefetch = 0 : i64, scratch_operands = 0 : i64, tpu.core_type = #tpu.core_type<tc>, window_params = [{transform_indices = @transform_0, window_bounds = array<i64: 16, 32>}, {pipeline_mode = #tpu.pipeline_mode<synchronous>, transform_indices = @transform_1, window_bounds = array<i64: 16, 32>}, {pipeline_mode = #tpu.pipeline_mode<synchronous>, transform_indices = @transform_2, window_bounds = array<i64: 1, 16>}, {transform_indices = @transform_3, window_bounds = array<i64: 16, 16>}]} {
    %c0 = arith.constant 0 : index
    %c0_0 = arith.constant 0 : index
    %0 = vector.load %arg1[%c0, %c0_0] : memref<16x32xf32, #tpu.memory_space<vmem>>, vector<16x32xf32>
    %c0_1 = arith.constant 0 : index
    %c0_2 = arith.constant 0 : index
    %1 = vector.load %arg2[%c0_1, %c0_2] : memref<16x32xf32, #tpu.memory_space<vmem>>, vector<16x32xf32>
    %cst = arith.constant dense<0.000000e+00> : vector<16x16xf32>
    %2 = tpu.matmul %0, %1, %cst {dimension_numbers = #tpu.dot_dimension_numbers<[1], [1], [0], [0], [0, 0, 1, 0], [], []>} : vector<16x32xf32>, vector<16x32xf32>, vector<16x16xf32> -> vector<16x16xf32>
    %c0_3 = arith.constant 0 : index
    %c0_4 = arith.constant 0 : index
    %3 = vector.load %arg3[%c0_3, %c0_4] : memref<1x16xf32, #tpu.memory_space<vmem>>, vector<1x16xf32>
    %4 = vector.broadcast %3 : vector<1x16xf32> to vector<16x16xf32>
    %5 = arith.addf %2, %4 : vector<16x16xf32>
    %c0_5 = arith.constant 0 : index
    %c0_6 = arith.constant 0 : index
    %6 = vector.load %arg4[%c0_5, %c0_6] : memref<16x16xf32, #tpu.memory_space<vmem>>, vector<16x16xf32>
    tpu.vector_store %arg4[%c0_5, %c0_6], %5 {strides = array<i32>} : memref<16x16xf32, #tpu.memory_space<vmem>>, vector<16x16xf32>,
    return
  }
  func.func @transform_0(%arg0: i32) -> (i32, i32) {
    %c0_i32 = arith.constant 0 : i32
    %c0_i32_0 = arith.constant 0 : i32
    return %arg0, %c0_i32 : i32, i32
  }
  func.func @transform_1(%arg0: i32) -> (i32, i32) {
    %c0_i32 = arith.constant 0 : i32
    %c0_i32_0 = arith.constant 0 : i32
    %c0_i32_1 = arith.constant 0 : i32
    return %c0_i32, %c0_i32_0 : i32, i32
  }
  func.func @transform_2(%arg0: i32) -> (i32, i32) {
    %c0_i32 = arith.constant 0 : i32
    %c0_i32_0 = arith.constant 0 : i32
    %c0_i32_1 = arith.constant 0 : i32
    return %c0_i32, %c0_i32_0 : i32, i32
  }
  func.func @transform_3(%arg0: i32) -> (i32, i32) {
    %c0_i32 = arith.constant 0 : i32
    %c0_i32_0 = arith.constant 0 : i32
    return %arg0, %c0_i32 : i32, i32
  }
}

</mosaic_0001>

<llo_original>
// kernel: tpu_custom_call.1
$region0: #{tpu_custom_call.1}
  #allocation0 [shape = 'u32[]', space=smem, size = 0x4, offset = 0x4, fixed_abs, tag = 'smem constant byte address 0x4 - core index']
  #allocation1 [shape = 'u32[144,128]{1,0:T(1,128)}', space=vmem, size = 0x12000, scoped, tag = 'internal scratch']
  %s0 = inlined_call_operand.hbm [shape: f32[16,32], index: 0, kind: input, shape index: {}]
  %s1 = inlined_call_operand.hbm [shape: f32[16,32], index: 1, kind: input, shape index: {}]
  %s2 = inlined_call_operand.vmem [shape: f32[1,16], index: 2, kind: input, shape index: {}]
  %s3 = inlined_call_operand.hbm [shape: f32[16,16], index: 3, kind: output, shape index: {}]
  %s4 = sld [smem:[#allocation0]]
  $region30: #{tpu_custom_call.1} parent=0
    _
  %s6 = ssub.s32 1, %s4
  %s7 = scalar_select 0, %s6, %s4
  $region1: #{tpu_custom_call.1} parent=0
    #allocation2 [shape = 'u8[8192]{0}', space=vmem, size = 0x2000, scoped, tag = 'input window, operand 0, single buffered']
    #allocation3 [shape = 's32[1]{0}', space=sflag, size = 0x4, scoped, tag = 'scoped memory for tpu_custom_call.1']
    #allocation4 [shape = 's32[1]{0}', space=sflag, size = 0x4, scoped, tag = 'scoped memory for tpu_custom_call.1']
    #allocation5 [shape = 'u8[8192]{0}', space=vmem, size = 0x2000, scoped, tag = 'input window, operand 1, single buffered']
    #allocation6 [shape = 's32[1]{0}', space=sflag, size = 0x4, scoped, tag = 'scoped memory for tpu_custom_call.1']
    #allocation7 [shape = 'u8[8192]{0}', space=vmem, size = 0x2000, scoped, tag = 'output window, operand 0, single buffered']
    %8 = vsyncpa [#allocation3], 0
    %9 = vsyncpa [#allocation6], 0
    %10 = vsyncpa [#allocation4], 0
    // Predicated region
    $region2: #{tpu_custom_call.1} parent=1 // pred_check
      _
    $region3: #{tpu_custom_call.1} parent=1 // pred_check_branch
      %12 = sbr.rel (0) target = $region5
    $region4: #{tpu_custom_call.1} parent=1 // pred_region
      %s14 = ssub.s32 256, 256
      %15 = vsyncadd [#allocation3], %s14
      %s16 = sshll.u32 [#allocation2], 4
      %s17 = int_to_ptr.vmem [resolvable:$true] %s16
      %22 = dma.hbm_to_vmem [thread:$0]  %s0, 256, %s17, [#allocation3], 128, 128, 8
    $region5: #{tpu_custom_call.1} parent=1 // pred_fallthru
      _
    // Predicated region
    $region6: #{tpu_custom_call.1} parent=1 // pred_check
      _
    $region7: #{tpu_custom_call.1} parent=1 // pred_check_branch
      %24 = sbr.rel (0) target = $region9
    $region8: #{tpu_custom_call.1} parent=1 // pred_region
      %s26 = ssub.s32 256, 256
      %27 = vsyncadd [#allocation6], %s26
      %s28 = sshll.u32 [#allocation5], 4
      %s29 = int_to_ptr.vmem [resolvable:$true] %s28
      %34 = dma.hbm_to_vmem [thread:$0]  %s1, 256, %s29, [#allocation6], 128, 128, 8
    $region9: #{tpu_custom_call.1} parent=1 // pred_fallthru
      _
    // Predicated region
    $region10: #{tpu_custom_call.1} parent=1 // pred_check
      _
    $region11: #{tpu_custom_call.1} parent=1 // pred_check_branch
      %36 = sbr.rel (0) target = $region13
    $region12: #{tpu_custom_call.1} parent=1 // pred_region
      _
    $region13: #{tpu_custom_call.1} parent=1 // pred_fallthru
      _
    // Predicated region
    $region14: #{tpu_custom_call.1} parent=1 // pred_check
      _
    $region15: #{tpu_custom_call.1} parent=1 // pred_check_branch
      %38 = sbr.rel (0) target = $region17
    $region16: #{tpu_custom_call.1} parent=1 // pred_region
      %39 = dma.done [#allocation3], 256
    $region17: #{tpu_custom_call.1} parent=1 // pred_fallthru
      _
    // Predicated region
    $region18: #{tpu_custom_call.1} parent=1 // pred_check
      _
    $region19: #{tpu_custom_call.1} parent=1 // pred_check_branch
      %41 = sbr.rel (0) target = $region21
    $region20: #{tpu_custom_call.1} parent=1 // pred_region
      %42 = dma.done [#allocation6], 256
    $region21: #{tpu_custom_call.1} parent=1 // pred_fallthru
      _
    %v43 = vld [vmem:[#allocation2] sm:$0xff]
    %v44 = vld [vmem:[#allocation2 + $0x8] sm:$0xff]
    %v45 = vld [vmem:[#allocation5] sm:$0xff]
    %v46 = vld [vmem:[#allocation5 + $0x8] sm:$0xff]
    %v47 = vld [vmem:[%s2] sm:$0x1]
    %v49 = vlaneseq
    %v50 = vshrl.u32 %v49, 7
    %v51 = vsub.s32 0, %v50
    %v52 = vrot.slane %v47, %v51
    %vm54 = vcmask 261120
    %v56 = vsel %vm54, %v43, 0
    %v59 = vsel %vm54, %v44, 0
    %v62 = vsel %vm54, %v45, 0
    %v65 = vsel %vm54, %v46, 0
    %67 = vmatprep.subr.mxu0 0.0
    %68 = vmatpush1.xpose.msra.mxu0 0.0
    %69 = vmatprep.subr.mxu0 0.0
    %70 = vmatpush1.xpose.msra.mxu0 0.0
    %71 = vmatprep.subr.mxu0 0.0
    %72 = vmatpush1.xpose.msra.mxu0 0.0
    %73 = vmatprep.subr.mxu0 0.0
    %74 = vmatpush1.xpose.msra.mxu0 0.0
    %75 = vmatprep.subr.mxu0 0.0
    %76 = vmatpush1.xpose.msra.mxu0 0.0
    %77 = vmatprep.subr.mxu0 0.0
    %78 = vmatpush1.xpose.msra.mxu0 0.0
    %79 = vmatprep.subr.mxu0 0.0
    %80 = vmatpush1.xpose.msra.mxu0 0.0
    %81 = vmatprep.subr.mxu0 0.0
    %82 = vmatpush1.xpose.msra.mxu0 0.0
    %83 = vmatprep.subr.mxu0 0.0
    %84 = vmatpush1.xpose.msra.mxu0 0.0
    %85 = vmatprep.subr.mxu0 0.0
    %86 = vmatpush1.xpose.msra.mxu0 0.0
    %87 = vmatprep.subr.mxu0 0.0
    %88 = vmatpush1.xpose.msra.mxu0 0.0
    %89 = vmatprep.subr.mxu0 0.0
    %90 = vmatpush1.xpose.msra.mxu0 0.0
    %91 = vmatprep.subr.mxu0 0.0
    %92 = vmatpush1.xpose.msra.mxu0 0.0
    %93 = vmatprep.subr.mxu0 0.0
    %94 = vmatpush1.xpose.msra.mxu0 0.0
    %95 = vmatprep.subr.mxu0 0.0
    %96 = vmatpush1.xpose.msra.mxu0 %v65
    %97 = vmatprep.subr.mxu0 0.0
    %98 = vmatpush1.xpose.msra.mxu0 %v62
    %99 = vmatprep.subr.mxu0 0.0
    %100 = vmatpush2.xpose.msra.mxu0 0.0
    %101 = vmatprep.subr.mxu0 0.0
    %102 = vmatpush2.xpose.msra.mxu0 0.0
    %103 = vmatprep.subr.mxu0 0.0
    %104 = vmatpush2.xpose.msra.mxu0 0.0
    %105 = vmatprep.subr.mxu0 0.0
    %106 = vmatpush2.xpose.msra.mxu0 0.0
    %107 = vmatprep.subr.mxu0 0.0
    %108 = vmatpush2.xpose.msra.mxu0 0.0
    %109 = vmatprep.subr.mxu0 0.0
    %110 = vmatpush2.xpose.msra.mxu0 0.0
    %111 = vmatprep.subr.mxu0 0.0
    %112 = vmatpush2.xpose.msra.mxu0 0.0
    %113 = vmatprep.subr.mxu0 0.0
    %114 = vmatpush2.xpose.msra.mxu0 0.0
    %115 = vmatprep.subr.mxu0 0.0
    %116 = vmatpush2.xpose.msra.mxu0 0.0
    %117 = vmatprep.subr.mxu0 0.0
    %118 = vmatpush2.xpose.msra.mxu0 0.0
    %119 = vmatprep.subr.mxu0 0.0
    %120 = vmatpush2.xpose.msra.mxu0 0.0
    %121 = vmatprep.subr.mxu0 0.0
    %122 = vmatpush2.xpose.msra.mxu0 0.0
    %123 = vmatprep.subr.mxu0 0.0
    %124 = vmatpush2.xpose.msra.mxu0 0.0
    %125 = vmatprep.subr.mxu0 0.0
    %126 = vmatpush2.xpose.msra.mxu0 0.0
    %127 = vmatprep.subr.mxu0 0.0
    %128 = vmatpush2.xpose.msra.mxu0 0.0
    %129 = vmatprep.subr.mxu0 0.0
    %130 = vmatpush2.xpose.msra.mxu0 0.0
    %131 = vmatprep.mubr.f32.mxu0 0.0
    %132 = vmatmul.mubr.f32.gmra.mxu0 %v56
    %v133 = vpop.f32.mrf.mxu0
    %v134 = vadd.f32 %v52, %v133
    %v135 = vpop.f32.mrf.mxu0
    %136 = vmatprep.mubr.f32.mxu0 0.0
    %137 = vmatmul.mubr.f32.gmra.mxu0 %v59
    %v138 = vpop.f32.mrf.mxu0
    %v139 = vadd.f32 %v52, %v138
    %v140 = vpop.f32.mrf.mxu0
    %141 = vdwg.mxu0
    %vm142 = vcmask 130048
    %143 = vst.msk [vmem:[#allocation7] sm:$0xff] %vm142, %v134
    %144 = vst.msk [vmem:[#allocation7 + $0x8] sm:$0xff] %vm142, %v139
    // Predicated region
    $region22: #{tpu_custom_call.1} parent=1 // pred_check
      _
    $region23: #{tpu_custom_call.1} parent=1 // pred_check_branch
      %146 = sbr.rel (0) target = $region25
    $region24: #{tpu_custom_call.1} parent=1 // pred_region
      %s148 = ssub.s32 256, 256
      %149 = vsyncadd [#allocation4], %s148
      %s150 = sshll.u32 [#allocation7], 4
      %s151 = int_to_ptr.vmem [resolvable:$true] %s150
      %156 = dma.vmem_to_hbm [thread:$0]  %s151, 256, %s3, [#allocation4], 128, 128, 8
    $region25: #{tpu_custom_call.1} parent=1 // pred_fallthru
      _
    // Predicated region
    $region26: #{tpu_custom_call.1} parent=1 // pred_check
      _
    $region27: #{tpu_custom_call.1} parent=1 // pred_check_branch
      %158 = sbr.rel (0) target = $region29
    $region28: #{tpu_custom_call.1} parent=1 // pred_region
      %159 = dma.done [#allocation4], 256
    $region29: #{tpu_custom_call.1} parent=1 // pred_fallthru
      _
    %160 = vsyncpa [#allocation3], 1
    %161 = vsyncpa [#allocation6], 1
    %162 = vsyncpa [#allocation4], 1

</llo_original>
